<compile_context>
chip_gen: v7x
topology: tpu7x:2x2x1
jax: 0.10.0
libtpu: 0.0.40
codegen_flags: <defaults>
</compile_context>

<pallas_src>
import jax
import jax.numpy as jnp
from jax.experimental import pallas as pl
from jax.experimental.pallas import tpu as pltpu


def _round_up(x, m):
    return ((x + m - 1) // m) * m


def _cdiv(a, b):
    return (a + b - 1) // b


def _sublane_align(dtype):
    # f32 -> 8 rows, bf16 -> 16, int8/fp8 -> 32 (sub-32-bit packs along sublanes).
    return max(8, 32 // jnp.dtype(dtype).itemsize)


def _pick_tile(dim, target, align):
    """`target` for large dims, otherwise an `align`-rounded full-extent block."""
    if dim >= target:
        return target
    return _round_up(dim, align)


_HW_CFG = None


def _hw_config():
    """(vmem_limit_bytes, tm_target, tn_target, tk_target), derived once."""
    global _HW_CFG
    if _HW_CFG is None:
        try:
            vmem_cap = int(pltpu.get_tpu_info().vmem_capacity_bytes)
        except Exception:
            vmem_cap = 64 * 1024 * 1024          # conservative: v7x per-TC VMEM
        if vmem_cap >= 100 * 1024 * 1024:
            # v5e / v6e: 128 MiB VMEM. Large weight tiles -> long DMA bursts and
            # few grid steps; double-buffered f32 footprint ~30 MiB.
            _HW_CFG = (64 * 1024 * 1024, 512, 1024, 2048)
        else:
            # v7x: 64 MiB VMEM per TensorCore. Keep the double-buffered
            # footprint (~19 MiB f32) comfortably under budget.
            _HW_CFG = (48 * 1024 * 1024, 512, 512, 2048)
    return _HW_CFG


def _linear_kernel(x_ref, w_ref, b_ref, o_ref, acc_ref):
    # x_ref:   [tm, tk]        activation tile (leading src dims squeezed away)
    # w_ref:   [tk, tn]        weight tile, MXU-native [K, N] layout
    # b_ref:   [1,  tn]        bias tile
    # o_ref:   [tm, tn]        output tile
    # acc_ref: [tm, tn] f32    accumulator, resident across the K grid axis
    k = pl.program_id(2)

    @pl.when(k == 0)
    def _():
        # Initialise the accumulator with the broadcast bias -> no epilogue add.
        acc_ref[...] = jnp.broadcast_to(
            b_ref[...].astype(jnp.float32), acc_ref.shape)

    x = x_ref[...]
    w = w_ref[...]
    if x.dtype != w.dtype:            # optional low-precision weight path
        x = x.astype(w.dtype)
    acc_ref[...] += jnp.dot(x, w, preferred_element_type=jnp.float32)

    @pl.when(k == pl.num_programs(2) - 1)
    def _():
        o_ref[...] = acc_ref[...].astype(o_ref.dtype)


def classifier_output_forward(src, mask, w_kn, b2, out_features, in_features):
    """y = src[0, 0] @ W^T + b, with W pre-transposed/padded to w_kn [Kp, Np].

    src:  [S0, S1, M, in_features]
    mask: ignored (signature parity with the PyTorch module)
    w_kn: [Kp, Np] weight already in [K, N] layout, K/N tails zero-padded
    b2:   [1,  Np] bias, zero-padded
    returns [M, out_features]
    """
    del mask  # unused, exactly like the reference forward

    # TODO(synk): only the 4-D src layout ([?, ?, M, in_features]) is handled;
    # other src ranks would need leading-dim flattening.
    assert src.ndim == 4, "expected src of shape [S0, S1, M, in_features]"
    _, _, M, K = src.shape
    assert K == in_features, "in_features mismatch between src and weight"
    Kp, Np = w_kn.shape
    N = out_features

    vmem_limit, tm_target, tn_target, tk_target = _hw_config()

    tk = _pick_tile(K, tk_target, 128)
    assert Kp % tk == 0, "weight K padding inconsistent with tile size"

    sub = _sublane_align(src.dtype)
    need_k_pad = Kp != K
    need_m_pad = (M % sub) != 0

    if not (need_k_pad or need_m_pad):
        # Zero-copy: activation tiles are read straight out of src[0, 0] by the
        # BlockSpec; the two leading axes are squeezed size-1 blocks at index 0.
        x_arg = src
        m_rows = M
        x_4d = True
    else:
        # Ragged K (and/or M) tail: zero-fill only the tails of the [M, K] slab;
        # the weight is never touched on the per-call path.
        Mp = _round_up(M, sub)
        x_arg = jnp.pad(src[0, 0], ((0, Mp - M), (0, Kp - K)))
        m_rows = Mp
        x_4d = False

    tm = _pick_tile(m_rows, tm_target, sub)
    m_blocks = _cdiv(m_rows, tm)

    tn = _pick_tile(Np, tn_target, 128)
    # Guarantee >= 2 tiles on a parallel axis so both v7x TensorCores get work
    # when M fits in a single tile (typical classifier head).
    if m_blocks == 1 and _cdiv(Np, tn) == 1 and Np >= 256:
        tn = _round_up(_cdiv(Np, 2), 128)
    n_blocks = _cdiv(Np, tn)
    k_blocks = Kp // tk

    if x_4d:
        x_spec = pl.BlockSpec((None, None, tm, tk), lambda i, j, k: (0, 0, i, k))
    else:
        x_spec = pl.BlockSpec((tm, tk), lambda i, j, k: (i, k))

    out_dtype = src.dtype

    # Advisory scheduling hint: counts weight/bias re-reads per M tile and
    # activation re-reads per N tile.
    x_bytes = m_rows * Kp * jnp.dtype(src.dtype).itemsize
    w_bytes = Kp * Np * jnp.dtype(w_kn.dtype).itemsize
    b_bytes = Np * jnp.dtype(b2.dtype).itemsize
    o_bytes = m_rows * Np * jnp.dtype(out_dtype).itemsize
    cost = pl.CostEstimate(
        flops=2 * (m_blocks * tm) * Kp * (n_blocks * tn),
        transcendentals=0,
        bytes_accessed=x_bytes * n_blocks + (w_bytes + b_bytes) * m_blocks + o_bytes,
    )

    out = pl.pallas_call(
        _linear_kernel,
        out_shape=jax.ShapeDtypeStruct((m_rows, Np), out_dtype),
        grid_spec=pltpu.PrefetchScalarGridSpec(
            num_scalar_prefetch=0,
            grid=(m_blocks, n_blocks, k_blocks),
            in_specs=[
                x_spec,
                pl.BlockSpec((tk, tn), lambda i, j, k: (k, j)),   # weight [K, N]
                pl.BlockSpec((1, tn), lambda i, j, k: (0, j)),    # bias
            ],
            out_specs=pl.BlockSpec((tm, tn), lambda i, j, k: (i, j)),
            scratch_shapes=[pltpu.VMEM((tm, tn), jnp.float32)],
        ),
        compiler_params=pltpu.CompilerParams(
            dimension_semantics=("parallel", "parallel", "arbitrary"),
            vmem_limit_bytes=vmem_limit,
        ),
        cost_estimate=cost,
    )(x_arg, w_kn, b2)

    if m_rows != M or Np != N:
        out = out[:M, :N]
    return out


class ClassifierOutputPallas:
    """Pallas TPU port of `classifierOutput`: y = Linear(in, out)(src[0][0]).

    All parameter layout work (transpose to MXU-native [K, N], K/N tail
    zero-padding, optional low-precision cast) happens ONCE here, off the
    per-call path.
    """

    def __init__(self, weight, bias, *, param_dtype=None):
        weight = jnp.asarray(weight)   # [out_features, in_features] (PyTorch)
        bias = jnp.asarray(bias)       # [out_features]
        if param_dtype is not None:    # e.g. jnp.bfloat16 on v6e/v7x (optional)
            weight = weight.astype(param_dtype)
            bias = bias.astype(param_dtype)

        N, K = weight.shape
        self.out_features = int(N)
        self.in_features = int(K)

        _, _, _, tk_target = _hw_config()
        tk = _pick_tile(K, tk_target, 128)
        Kp = _round_up(K, tk)
        Np = _round_up(N, 128)

        w_kn = weight.T                # [K, N] -- MXU-native RHS layout
        if (Kp, Np) != (K, N):
            w_kn = jnp.pad(w_kn, ((0, Kp - K), (0, Np - N)))
        b2 = bias.reshape(1, N)
        if Np != N:
            b2 = jnp.pad(b2, ((0, 0), (0, Np - N)))

        self.w_kn = w_kn
        self.b2 = b2

    def __call__(self, src, mask):
        return classifier_output_forward(
            src, mask, self.w_kn, self.b2, self.out_features, self.in_features)


if __name__ == "__main__":
    def run_case(S0, S1, M, in_features, out_features, key):
        k_src, k_w, k_b = jax.random.split(key, 3)
        src = jax.random.normal(k_src, (S0, S1, M, in_features), dtype=jnp.float32)
        mask = jnp.zeros((M, M), dtype=jnp.float32)   # unused, shape arbitrary
        bound = 1.0 / (in_features ** 0.5)
        weight = jax.random.uniform(k_w, (out_features, in_features),
                                    minval=-bound, maxval=bound, dtype=jnp.float32)
        bias = jax.random.uniform(k_b, (out_features,),
                                  minval=-bound, maxval=bound, dtype=jnp.float32)

        module = ClassifierOutputPallas(weight, bias)
        out = jax.block_until_ready(module(src, mask))

        ref = src[0, 0] @ weight.T + bias
        assert out.shape == (M, out_features), out.shape
        err = float(jnp.max(jnp.abs(out - ref)))
        assert jnp.allclose(out, ref, atol=1e-4, rtol=1e-4), err

    key = jax.random.PRNGKey(0)
    k1, k2 = jax.random.split(key)
    # Aligned case: zero-copy 4-D src path (squeezed leading dims), 2 N tiles.
    run_case(S0=2, S1=3, M=8, in_features=128, out_features=256, key=k1)
    # Unaligned case: ragged K / N tails (K-only slab pad, padded-N output slice),
    # single K step (both pl.when branches fire in the same iteration).
    run_case(S0=2, S1=3, M=8, in_features=40, out_features=10, key=k2)

    print("KERNEL_OK")
</pallas_src>

<mosaic_0001>
module attributes {stable_mosaic.version = 11 : i64} {
  func.func @_linear_kernel(%arg0: i32, %arg1: i32, %arg2: i32, %arg3: memref<1x1x8x128xf32, #tpu.memory_space<vmem>>, %arg4: memref<128x128xf32, #tpu.memory_space<vmem>>, %arg5: memref<1x128xf32, #tpu.memory_space<vmem>>, %arg6: memref<8x128xf32, #tpu.memory_space<vmem>>, %arg7: memref<8x128xf32, #tpu.memory_space<vmem>>) attributes {dimension_semantics = [#tpu.dimension_semantics<parallel>, #tpu.dimension_semantics<parallel>, #tpu.dimension_semantics<arbitrary>], iteration_bounds = array<i64: 1, 2, 1>, scalar_prefetch = 0 : i64, scratch_operands = 1 : i64, tpu.core_type = #tpu.core_type<tc>, window_params = [{transform_indices = @transform_0, window_bounds = array<i64: 1, 1, 8, 128>}, {transform_indices = @transform_1, window_bounds = array<i64: 128, 128>}, {transform_indices = @transform_2, window_bounds = array<i64: 1, 128>}, {transform_indices = @transform_3, window_bounds = array<i64: 8, 128>}]} {
    %c0_i32 = arith.constant 0 : i32
    %0 = arith.cmpi eq, %arg2, %c0_i32 : i32
    %1 = arith.extui %0 : i1 to i32
    %c0_i32_0 = arith.constant 0 : i32
    %2 = arith.cmpi ne, %1, %c0_i32_0 : i32
    scf.if %2 {
      %c0_12 = arith.constant 0 : index
      %c0_13 = arith.constant 0 : index
      %13 = vector.load %arg5[%c0_12, %c0_13] : memref<1x128xf32, #tpu.memory_space<vmem>>, vector<1x128xf32>
      %14 = vector.shape_cast %13 : vector<1x128xf32> to vector<1x128xf32>
      %15 = vector.broadcast %14 : vector<1x128xf32> to vector<8x128xf32>
      %c0_14 = arith.constant 0 : index
      %c0_15 = arith.constant 0 : index
      %16 = vector.load %arg7[%c0_14, %c0_15] : memref<8x128xf32, #tpu.memory_space<vmem>>, vector<8x128xf32>
      tpu.vector_store %arg7[%c0_14, %c0_15], %15 {strides = array<i32>} : memref<8x128xf32, #tpu.memory_space<vmem>>, vector<8x128xf32>,
    } else {
    }
    %c0 = arith.constant 0 : index
    %c0_1 = arith.constant 0 : index
    %c0_2 = arith.constant 0 : index
    %c0_3 = arith.constant 0 : index
    %3 = vector.load %arg3[%c0, %c0_1, %c0_2, %c0_3] : memref<1x1x8x128xf32, #tpu.memory_space<vmem>>, vector<1x1x8x128xf32>
    %4 = vector.shape_cast %3 : vector<1x1x8x128xf32> to vector<8x128xf32>
    %c0_4 = arith.constant 0 : index
    %c0_5 = arith.constant 0 : index
    %5 = vector.load %arg4[%c0_4, %c0_5] : memref<128x128xf32, #tpu.memory_space<vmem>>, vector<128x128xf32>
    %c0_6 = arith.constant 0 : index
    %c0_7 = arith.constant 0 : index
    %6 = vector.load %arg7[%c0_6, %c0_7] : memref<8x128xf32, #tpu.memory_space<vmem>>, vector<8x128xf32>
    %cst = arith.constant dense<0.000000e+00> : vector<8x128xf32>
    %7 = tpu.matmul %4, %5, %cst {dimension_numbers = #tpu.dot_dimension_numbers<[1], [0], [0], [1], [0, 0, 1, 1], [], []>} : vector<8x128xf32>, vector<128x128xf32>, vector<8x128xf32> -> vector<8x128xf32>
    %8 = arith.addf %6, %7 : vector<8x128xf32>
    %c0_8 = arith.constant 0 : index
    %c0_9 = arith.constant 0 : index
    %9 = vector.load %arg7[%c0_8, %c0_9] : memref<8x128xf32, #tpu.memory_space<vmem>>, vector<8x128xf32>
    tpu.vector_store %arg7[%c0_8, %c0_9], %8 {strides = array<i32>} : memref<8x128xf32, #tpu.memory_space<vmem>>, vector<8x128xf32>,
    %c0_i32_10 = arith.constant 0 : i32
    %10 = arith.cmpi eq, %arg2, %c0_i32_10 : i32
    %11 = arith.extui %10 : i1 to i32
    %c0_i32_11 = arith.constant 0 : i32
    %12 = arith.cmpi ne, %11, %c0_i32_11 : i32
    scf.if %12 {
      %c0_12 = arith.constant 0 : index
      %c0_13 = arith.constant 0 : index
      %13 = vector.load %arg7[%c0_12, %c0_13] : memref<8x128xf32, #tpu.memory_space<vmem>>, vector<8x128xf32>
      %c0_14 = arith.constant 0 : index
      %c0_15 = arith.constant 0 : index
      %14 = vector.load %arg6[%c0_14, %c0_15] : memref<8x128xf32, #tpu.memory_space<vmem>>, vector<8x128xf32>
      tpu.vector_store %arg6[%c0_14, %c0_15], %13 {strides = array<i32>} : memref<8x128xf32, #tpu.memory_space<vmem>>, vector<8x128xf32>,
    } else {
    }
    return
  }
  func.func @transform_0(%arg0: i32, %arg1: i32, %arg2: i32) -> (i32, i32, i32, i32) {
    %c0_i32 = arith.constant 0 : i32
    %c0_i32_0 = arith.constant 0 : i32
    %c0_i32_1 = arith.constant 0 : i32
    return %c0_i32, %c0_i32_0, %arg0, %arg2 : i32, i32, i32, i32
  }
  func.func @transform_1(%arg0: i32, %arg1: i32, %arg2: i32) -> (i32, i32) {
    %c0_i32 = arith.constant 0 : i32
    return %arg2, %arg1 : i32, i32
  }
  func.func @transform_2(%arg0: i32, %arg1: i32, %arg2: i32) -> (i32, i32) {
    %c0_i32 = arith.constant 0 : i32
    %c0_i32_0 = arith.constant 0 : i32
    return %c0_i32, %arg1 : i32, i32
  }
  func.func @transform_3(%arg0: i32, %arg1: i32, %arg2: i32) -> (i32, i32) {
    %c0_i32 = arith.constant 0 : i32
    return %arg0, %arg1 : i32, i32
  }
}

</mosaic_0001>

<llo_original>
// kernel: tpu_custom_call.1
$region0: #{tpu_custom_call.1}
  #allocation0 [shape = 'u32[]', space=smem, size = 0x4, offset = 0x4, fixed_abs, tag = 'smem constant byte address 0x4 - core index']
  #allocation1 [shape = 'u32[144,128]{1,0:T(1,128)}', space=vmem, size = 0x12000, scoped, tag = 'internal scratch']
  #allocation2 [shape = 'f32[8,128]{1,0:T(8,128)}', space=vmem, size = 0x1000, scoped, tag = 'scratch operand']
  %s0 = inlined_call_operand.hbm [shape: f32[2,3,8,128], index: 0, kind: input, shape index: {}]
  %s1 = inlined_call_operand.hbm [shape: f32[128,256], index: 1, kind: input, shape index: {}]
  %s2 = inlined_call_operand.vmem [shape: f32[1,256], index: 2, kind: input, shape index: {}]
  %s3 = inlined_call_operand.hbm [shape: f32[8,256], index: 3, kind: output, shape index: {}]
  %s4 = sld [smem:[#allocation0]]
  $region61: #{tpu_custom_call.1} parent=0
    _
  %s6 = ssub.s32 1, %s4
  %s7 = scalar_select 0, %s6, %s4
  $region1: #{tpu_custom_call.1} parent=0
    #allocation3 [shape = 'u8[4096]{0}', space=vmem, size = 0x1000, scoped, tag = 'input window, operand 0, single buffered']
    #allocation4 [shape = 's32[2]{0}', space=sflag, size = 0x8, scoped, tag = 'scoped memory for tpu_custom_call.1']
    #allocation5 [shape = 's32[2]{0}', space=sflag, size = 0x8, scoped, tag = 'scoped memory for tpu_custom_call.1']
    #allocation6 [shape = 'u8[131072]{0}', space=vmem, size = 0x20000, scoped, tag = 'input window, operand 1']
    #allocation7 [shape = 's32[2]{0}', space=sflag, size = 0x8, scoped, tag = 'scoped memory for tpu_custom_call.1']
    #allocation8 [shape = 'u8[8192]{0}', space=vmem, size = 0x2000, scoped, tag = 'output window, operand 0']
    %8 = vsyncpa [#allocation4], 0
    %9 = vsyncpa [#allocation7], 0
    %s10 = scalar_lea.sflag [#allocation7], 1
    %11 = vsyncpa %s10, 0
    %12 = vsyncpa [#allocation5], 0
    %s13 = scalar_lea.sflag [#allocation5], 1
    %14 = vsyncpa %s13, 0
    loop: start=0, step=1, limit=4
    $region2: #{tpu_custom_call.1} parent=1 // loop_pre_header
      _
    $region3: #{tpu_custom_call.1} parent=1 // loop_header
      %s16 = sphi 0, %s20
      %p17 = scmp.ge.s32.totalorder %s16, 4
      %s23 = sphi 0, %s42
      %s24 = sphi 0, %s38
      %s25 = sphi 0, %s34
      %s26 = sphi 0, %s23
      %s27 = sphi 0, %s24
      %s28 = sphi 0, %s25
      %s29 = sphi 0, %s26
      %s30 = sphi 0, %s27
      %s31 = sphi 0, %s28
      %s47 = sphi 0, %s49
      %s50 = sphi 0, %s47
      %s51 = sphi 0, %s50
      %s67 = sphi 0, %s51
      %s75 = sphi 0, %s77
      %s78 = sphi 0, %s75
      %s79 = sphi 0, %s78
      %s95 = sphi 0, %s79
      %s101 = sphi 0, %s103
      %s104 = sphi 0, %s101
      %s105 = sphi 0, %s104
      %s121 = sphi 0, %s105
      %s129 = sphi 0, %s131
      %s132 = sphi 0, %s129
      %s133 = sphi 0, %s132
      %s149 = sphi 0, %s133
    $region4: #{tpu_custom_call.1} parent=1 // loop_header_branch
      %19 = sbr.rel (%p17) target = $region8
    $region5: #{tpu_custom_call.1} parent=1 // loop_body
      %s21 = ssub.s32 %s16, 1
      %s22 = ssub.s32 %s16, 2
      %s32 = sadd.s32 1, %s25
      %p33 = scmp.ge.s32.totalorder %s32, 1
      %s34 = scalar_select %p33, 0, %s32
      %s35 = sadd.s32 1, %s24
      %s36 = scalar_select %p33, %s35, %s24
      %p37 = scmp.ge.s32.totalorder %s36, 2
      %s38 = scalar_select %p37, 0, %s36
      %s39 = sadd.s32 1, %s23
      %s40 = scalar_select %p37, %s39, %s23
      %p41 = scmp.ge.s32.totalorder %s40, 1
      %s42 = scalar_select %p41, 0, %s40
      %s43 = ssub.s32 %s23, %s42
      %s44 = ssub.s32 %s25, %s34
      %s45 = sor.u32 %s43, %s44
      %p46 = scmp.eq.s32.totalorder %s45, 0
      %s48 = sadd.s32 %s47, 1
      %s49 = scalar_select %p46, %s47, %s48
      %p52 = pneg %p46
      %p53 = scmp.eq.s32.totalorder %s16, 1
      %p54 = por %p52, %p53
      %p55 = scmp.ne.s32.totalorder %s47, %s50
      %p56 = scmp.eq.s32.totalorder %s16, 0
      %p57 = por %p55, %p56
      %p58 = scmp.ne.s32.totalorder %s47, %s50
      %p59 = scmp.eq.s32.totalorder %s21, 1
      %p60 = por %p58, %p59
      %p61 = scmp.ne.s32.totalorder %s50, %s51
      %p62 = scmp.eq.s32.totalorder %s21, 0
      %p63 = por %p61, %p62
      %p64 = scmp.ne.s32.totalorder %s50, %s51
      %p65 = scmp.eq.s32.totalorder %s22, 1
      %p66 = por %p64, %p65
      %p68 = scmp.ne.s32.totalorder %s51, %s67
      %p69 = scmp.eq.s32.totalorder %s22, 0
      %p70 = por %p68, %p69
      %s71 = ssub.s32 %s25, %s34
      %s72 = ssub.s32 %s24, %s38
      %s73 = sor.u32 %s71, %s72
      %p74 = scmp.eq.s32.totalorder %s73, 0
      %s76 = sadd.s32 %s75, 1
      %s77 = scalar_select %p74, %s75, %s76
      %p80 = pneg %p74
      %p81 = scmp.eq.s32.totalorder %s16, 1
      %p82 = por %p80, %p81
      %p83 = scmp.ne.s32.totalorder %s75, %s78
      %p84 = scmp.eq.s32.totalorder %s16, 0
      %p85 = por %p83, %p84
      %p86 = scmp.ne.s32.totalorder %s75, %s78
      %p87 = scmp.eq.s32.totalorder %s21, 1
      %p88 = por %p86, %p87
      %p89 = scmp.ne.s32.totalorder %s78, %s79
      %p90 = scmp.eq.s32.totalorder %s21, 0
      %p91 = por %p89, %p90
      %p92 = scmp.ne.s32.totalorder %s78, %s79
      %p93 = scmp.eq.s32.totalorder %s22, 1
      %p94 = por %p92, %p93
      %p96 = scmp.ne.s32.totalorder %s79, %s95
      %p97 = scmp.eq.s32.totalorder %s22, 0
      %p98 = por %p96, %p97
      %s99 = ssub.s32 %s24, %s38
      %p100 = scmp.eq.s32.totalorder %s99, 0
      %s102 = sadd.s32 %s101, 1
      %s103 = scalar_select %p100, %s101, %s102
      %p106 = pneg %p100
      %p107 = scmp.eq.s32.totalorder %s16, 1
      %p108 = por %p106, %p107
      %p109 = scmp.ne.s32.totalorder %s101, %s104
      %p110 = scmp.eq.s32.totalorder %s16, 0
      %p111 = por %p109, %p110
      %p112 = scmp.ne.s32.totalorder %s101, %s104
      %p113 = scmp.eq.s32.totalorder %s21, 1
      %p114 = por %p112, %p113
      %p115 = scmp.ne.s32.totalorder %s104, %s105
      %p116 = scmp.eq.s32.totalorder %s21, 0
      %p117 = por %p115, %p116
      %p118 = scmp.ne.s32.totalorder %s104, %s105
      %p119 = scmp.eq.s32.totalorder %s22, 1
      %p120 = por %p118, %p119
      %p122 = scmp.ne.s32.totalorder %s105, %s121
      %p123 = scmp.eq.s32.totalorder %s22, 0
      %p124 = por %p122, %p123
      %s125 = ssub.s32 %s23, %s42
      %s126 = ssub.s32 %s24, %s38
      %s127 = sor.u32 %s125, %s126
      %p128 = scmp.eq.s32.totalorder %s127, 0
      %s130 = sadd.s32 %s129, 1
      %s131 = scalar_select %p128, %s129, %s130
      %p134 = pneg %p128
      %p135 = scmp.eq.s32.totalorder %s16, 1
      %p136 = por %p134, %p135
      %p137 = scmp.ne.s32.totalorder %s129, %s132
      %p138 = scmp.eq.s32.totalorder %s16, 0
      %p139 = por %p137, %p138
      %p140 = scmp.ne.s32.totalorder %s129, %s132
      %p141 = scmp.eq.s32.totalorder %s21, 1
      %p142 = por %p140, %p141
      %p143 = scmp.ne.s32.totalorder %s132, %s133
      %p144 = scmp.eq.s32.totalorder %s21, 0
      %p145 = por %p143, %p144
      %p146 = scmp.ne.s32.totalorder %s132, %s133
      %p147 = scmp.eq.s32.totalorder %s22, 1
      %p148 = por %p146, %p147
      %p150 = scmp.ne.s32.totalorder %s133, %s149
      %p151 = scmp.eq.s32.totalorder %s22, 0
      %p152 = por %p150, %p151
      %p153 = scmp.le.s32.totalorder 1, %s16
      %p154 = scmp.lt.s32.totalorder %s16, 3
      %p155 = pnand %p153, %p154
      %p156 = pneg %p155
      // Predicated region
      $region9: #{tpu_custom_call.1} parent=5 // pred_check
        _
      $region10: #{tpu_custom_call.1} parent=5 // pred_check_branch
        %158 = sbr.rel (%p155) target = $region12
      $region11: #{tpu_custom_call.1} parent=5 // pred_region
        %s159 = ssub.s32 %s16, 1
        // Predicated region
        $region13: #{tpu_custom_call.1} parent=11 // pred_check
          %p160 = pneg %p63
        $region14: #{tpu_custom_call.1} parent=11 // pred_check_branch
          %162 = sbr.rel (%p160) target = $region16
        $region15: #{tpu_custom_call.1} parent=11 // pred_region
          %s164 = ssub.s32 128, 128
          %165 = vsyncadd [#allocation4], %s164
          %s166 = sadd.s32 %s28, %s26
          %s167 = smul.addr %s166, 128
          %s168 = scalar_lea.hbm %s0, %s167
          %s170 = sshll.u32 [#allocation3], 4
          %s171 = int_to_ptr.vmem [resolvable:$true] %s170
          %173 = dma.hbm_to_vmem [thread:$0]  %s168, 128, %s171, [#allocation4]
        $region16: #{tpu_custom_call.1} parent=11 // pred_fallthru
          _
      $region12: #{tpu_custom_call.1} parent=5 // pred_fallthru
        _
      %p174 = scmp.lt.s32.totalorder %s16, 2
      // Predicated region
      $region17: #{tpu_custom_call.1} parent=5 // pred_check
        %p175 = pneg %p174
      $region18: #{tpu_custom_call.1} parent=5 // pred_check_branch
        %177 = sbr.rel (%p175) target = $region20
      $region19: #{tpu_custom_call.1} parent=5 // pred_region
        // Predicated region
        $region21: #{tpu_custom_call.1} parent=19 // pred_check
          %p178 = pneg %p85
        $region22: #{tpu_custom_call.1} parent=19 // pred_check_branch
          %180 = sbr.rel (%p178) target = $region24
        $region23: #{tpu_custom_call.1} parent=19 // pred_region
          %s181 = sand.u32 %s75, 1
          %s182 = scalar_lea.sflag [#allocation7], %s181
          %s183 = sand.u32 %s75, 1
          %s184 = smul.addr %s183, 128
          %s185 = scalar_lea.vmem [#allocation6], %s184
          %s186 = smul.u32 16, %s25
          %s188 = ssub.s32 2048, 2048
          %189 = vsyncadd %s182, %s188
          %s190 = smul.addr %s186, 2
          %s191 = sadd.s32 %s24, %s190
          %s192 = smul.addr %s191, 128
          %s193 = scalar_lea.hbm %s1, %s192
          %s194 = sshll.u32 %s185, 4
          %s195 = int_to_ptr.vmem [resolvable:$true] %s194
          %200 = dma.hbm_to_vmem [thread:$0]  %s193, 2048, %s195, %s182, 256, 128, 8
        $region24: #{tpu_custom_call.1} parent=19 // pred_fallthru
          _
        // Predicated region
        $region25: #{tpu_custom_call.1} parent=19 // pred_check
          %p201 = pneg %p111
        $region26: #{tpu_custom_call.1} parent=19 // pred_check_branch
          %203 = sbr.rel (%p201) target = $region28
        $region27: #{tpu_custom_call.1} parent=19 // pred_region
          %p204 = scmp.lt.s32.totalorder %s24, 1
          %s205 = scalar_select %p204, %s24, 1
          %s206 = scalar_lea.vmem %s2, %s205
        $region28: #{tpu_custom_call.1} parent=19 // pred_fallthru
          _
      $region20: #{tpu_custom_call.1} parent=5 // pred_fallthru
        _
      %p207 = scmp.le.s32.totalorder 1, %s16
      %p208 = scmp.lt.s32.totalorder %s16, 3
      %p209 = pnand %p207, %p208
      %p210 = pneg %p209
      // Predicated region
      $region29: #{tpu_custom_call.1} parent=5 // pred_check
        _
      $region30: #{tpu_custom_call.1} parent=5 // pred_check_branch
        %212 = sbr.rel (%p209) target = $region32
      $region31: #{tpu_custom_call.1} parent=5 // pred_region
        %s213 = ssub.s32 %s16, 1
        // Predicated region
        $region33: #{tpu_custom_call.1} parent=31 // pred_check
          %p214 = pneg %p63
        $region34: #{tpu_custom_call.1} parent=31 // pred_check_branch
          %216 = sbr.rel (%p214) target = $region36
        $region35: #{tpu_custom_call.1} parent=31 // pred_region
          %217 = dma.done [#allocation4], 128
        $region36: #{tpu_custom_call.1} parent=31 // pred_fallthru
          _
        %s218 = sand.u32 %s78, 1
        %s219 = scalar_lea.sflag [#allocation7], %s218
        %s220 = sand.u32 %s78, 1
        %s221 = smul.addr %s220, 128
        %s222 = scalar_lea.vmem [#allocation6], %s221
        // Predicated region
        $region37: #{tpu_custom_call.1} parent=31 // pred_check
          %p223 = pneg %p91
        $region38: #{tpu_custom_call.1} parent=31 // pred_check_branch
          %225 = sbr.rel (%p223) target = $region40
        $region39: #{tpu_custom_call.1} parent=31 // pred_region
          %226 = dma.done %s219, 2048
        $region40: #{tpu_custom_call.1} parent=31 // pred_fallthru
          _
        %p227 = pneg %p63
        %p228 = pneg %p60
        %s229 = sand.u32 %s78, 1
        %s230 = scalar_lea.sflag [#allocation7], %s229
        %s231 = sand.u32 %s78, 1
        %s232 = smul.addr %s231, 128
        %s233 = scalar_lea.vmem [#allocation6], %s232
        %p234 = pneg %p91
        %p235 = pneg %p88
        %p236 = scmp.lt.s32.totalorder %s27, 1
        %s237 = scalar_select %p236, %s27, 1
        %s238 = scalar_lea.vmem %s2, %s237
        %p239 = pneg %p117
        %p240 = pneg %p114
        %p241 = pneg %p145
        %p242 = pneg %p142
        %s243 = sand.u32 %s132, 1
        %s244 = scalar_lea.sflag [#allocation5], %s243
        %s245 = sand.u32 %s132, 1
        %s246 = smul.addr %s245, 8
        %s247 = scalar_lea.vmem [#allocation8], %s246
        %s248 = smul.u32 16, %s28
        %p249 = scmp.lt.s32.totalorder %s27, 1
        %s250 = scalar_select %p249, %s27, 1
        %s251 = scalar_lea.vmem %s2, %s250
        %p252 = scmp.eq.s32.totalorder %s28, 0
        // Predicated region
        $region41: #{tpu_custom_call.1} parent=31 // pred_check
          %p253 = pneg %p252
        $region42: #{tpu_custom_call.1} parent=31 // pred_check_branch
          %255 = sbr.rel (%p253) target = $region44
        $region43: #{tpu_custom_call.1} parent=31 // pred_region
          %v256 = vld [vmem:[%s251] sm:$0x1]
          %v258 = vlaneseq
          %v259 = vshrl.u32 %v258, 7
          %v260 = vsub.s32 0, %v259
          %v261 = vrot.slane %v256, %v260
          %263 = vst [vmem:[#allocation2] sm:$0xff] %v261
        $region44: #{tpu_custom_call.1} parent=31 // pred_fallthru
          _
        %v264 = vld [vmem:[#allocation3] sm:$0xff]
        %v265 = vld [vmem:[%s222] sm:$0xff]
        %v266 = vld [vmem:[%s222 + $0x8] sm:$0xff]
        %v267 = vld [vmem:[%s222 + $0x10] sm:$0xff]
        %v268 = vld [vmem:[%s222 + $0x18] sm:$0xff]
        %v269 = vld [vmem:[%s222 + $0x20] sm:$0xff]
        %v270 = vld [vmem:[%s222 + $0x28] sm:$0xff]
        %v271 = vld [vmem:[%s222 + $0x30] sm:$0xff]
        %v272 = vld [vmem:[%s222 + $0x38] sm:$0xff]
        %v273 = vld [vmem:[%s222 + $0x40] sm:$0xff]
        %v274 = vld [vmem:[%s222 + $0x48] sm:$0xff]
        %v275 = vld [vmem:[%s222 + $0x50] sm:$0xff]
        %v276 = vld [vmem:[%s222 + $0x58] sm:$0xff]
        %v277 = vld [vmem:[%s222 + $0x60] sm:$0xff]
        %v278 = vld [vmem:[%s222 + $0x68] sm:$0xff]
        %v279 = vld [vmem:[%s222 + $0x70] sm:$0xff]
        %v280 = vld [vmem:[%s222 + $0x78] sm:$0xff]
        %v281 = vld [vmem:[#allocation2] sm:$0xff]
        %282 = vmatprep.subr.mxu0 0.0
        %283 = vmatpush1.msra.mxu0 %v265
        %284 = vmatprep.subr.mxu0 0.0
        %285 = vmatpush1.msra.mxu0 %v266
        %286 = vmatprep.subr.mxu0 0.0
        %287 = vmatpush1.msra.mxu0 %v267
        %288 = vmatprep.subr.mxu0 0.0
        %289 = vmatpush1.msra.mxu0 %v268
        %290 = vmatprep.subr.mxu0 0.0
        %291 = vmatpush1.msra.mxu0 %v269
        %292 = vmatprep.subr.mxu0 0.0
        %293 = vmatpush1.msra.mxu0 %v270
        %294 = vmatprep.subr.mxu0 0.0
        %295 = vmatpush1.msra.mxu0 %v271
        %296 = vmatprep.subr.mxu0 0.0
        %297 = vmatpush1.msra.mxu0 %v272
        %298 = vmatprep.subr.mxu0 0.0
        %299 = vmatpush1.msra.mxu0 %v273
        %300 = vmatprep.subr.mxu0 0.0
        %301 = vmatpush1.msra.mxu0 %v274
        %302 = vmatprep.subr.mxu0 0.0
        %303 = vmatpush1.msra.mxu0 %v275
        %304 = vmatprep.subr.mxu0 0.0
        %305 = vmatpush1.msra.mxu0 %v276
        %306 = vmatprep.subr.mxu0 0.0
        %307 = vmatpush1.msra.mxu0 %v277
        %308 = vmatprep.subr.mxu0 0.0
        %309 = vmatpush1.msra.mxu0 %v278
        %310 = vmatprep.subr.mxu0 0.0
        %311 = vmatpush1.msra.mxu0 %v279
        %312 = vmatprep.subr.mxu0 0.0
        %313 = vmatpush1.msra.mxu0 %v280
        %314 = vmatprep.subr.mxu0 0.0
        %315 = vmatpush1.msra.mxu0 0.0
        %316 = vmatprep.subr.mxu0 0.0
        %317 = vmatpush1.msra.mxu0 0.0
        %318 = vmatprep.subr.mxu0 0.0
        %319 = vmatpush1.msra.mxu0 0.0
        %320 = vmatprep.subr.mxu0 0.0
        %321 = vmatpush1.msra.mxu0 0.0
        %322 = vmatprep.subr.mxu0 0.0
        %323 = vmatpush1.msra.mxu0 0.0
        %324 = vmatprep.subr.mxu0 0.0
        %325 = vmatpush1.msra.mxu0 0.0
        %326 = vmatprep.subr.mxu0 0.0
        %327 = vmatpush1.msra.mxu0 0.0
        %328 = vmatprep.subr.mxu0 0.0
        %329 = vmatpush1.msra.mxu0 0.0
        %330 = vmatprep.subr.mxu0 0.0
        %331 = vmatpush1.msra.mxu0 0.0
        %332 = vmatprep.subr.mxu0 0.0
        %333 = vmatpush1.msra.mxu0 0.0
        %334 = vmatprep.subr.mxu0 0.0
        %335 = vmatpush1.msra.mxu0 0.0
        %336 = vmatprep.subr.mxu0 0.0
        %337 = vmatpush1.msra.mxu0 0.0
        %338 = vmatprep.subr.mxu0 0.0
        %339 = vmatpush1.msra.mxu0 0.0
        %340 = vmatprep.subr.mxu0 0.0
        %341 = vmatpush1.msra.mxu0 0.0
        %342 = vmatprep.subr.mxu0 0.0
        %343 = vmatpush1.msra.mxu0 0.0
        %344 = vmatprep.subr.mxu0 0.0
        %345 = vmatpush1.msra.mxu0 0.0
        %346 = vmatprep.mubr.f32.mxu0 0.0
        %347 = vmatmul.mubr.f32.gmra.mrb[0].mxu0 %v264
        %v348 = vpop.f32.mrb[0].mxu0
        %v349 = vadd.f32 0.0, %v348
        %v350 = vpop.f32.mrb[0].mxu0
        %351 = vdwg.mxu0
        %v352 = vadd.f32 %v281, %v349
        %353 = vst [vmem:[#allocation2] sm:$0xff] %v352
        // Predicated region
        $region45: #{tpu_custom_call.1} parent=31 // pred_check
          %p354 = pneg %p252
        $region46: #{tpu_custom_call.1} parent=31 // pred_check_branch
          %356 = sbr.rel (%p354) target = $region48
        $region47: #{tpu_custom_call.1} parent=31 // pred_region
          %v357 = vld [vmem:[#allocation2] sm:$0xff]
          %358 = vst [vmem:[%s247] sm:$0xff] %v357
        $region48: #{tpu_custom_call.1} parent=31 // pred_fallthru
          _
        %s359 = sand.u32 %s132, 1
        %s360 = scalar_lea.sflag [#allocation5], %s359
        %s361 = sand.u32 %s132, 1
        %s362 = smul.addr %s361, 8
        %s363 = scalar_lea.vmem [#allocation8], %s362
        // Predicated region
        $region49: #{tpu_custom_call.1} parent=31 // pred_check
          %p364 = pneg %p142
        $region50: #{tpu_custom_call.1} parent=31 // pred_check_branch
          %366 = sbr.rel (%p364) target = $region52
        $region51: #{tpu_custom_call.1} parent=31 // pred_region
          %s368 = ssub.s32 128, 128
          %369 = vsyncadd %s360, %s368
          %s370 = smul.addr %s26, 2
          %s371 = sadd.s32 %s27, %s370
          %s372 = smul.addr %s371, 128
          %s373 = scalar_lea.hbm %s3, %s372
          %s375 = sshll.u32 %s363, 4
          %s376 = int_to_ptr.vmem [resolvable:$true] %s375
          %378 = dma.vmem_to_hbm [thread:$0]  %s376, 128, %s373, %s360
        $region52: #{tpu_custom_call.1} parent=31 // pred_fallthru
          _
      $region32: #{tpu_custom_call.1} parent=5 // pred_fallthru
        _
      %p379 = scmp.le.s32.totalorder 2, %s16
      // Predicated region
      $region53: #{tpu_custom_call.1} parent=5 // pred_check
        %p380 = pneg %p379
      $region54: #{tpu_custom_call.1} parent=5 // pred_check_branch
        %382 = sbr.rel (%p380) target = $region56
      $region55: #{tpu_custom_call.1} parent=5 // pred_region
        %s383 = ssub.s32 %s16, 2
        // Predicated region
        $region57: #{tpu_custom_call.1} parent=55 // pred_check
          %p384 = pneg %p148
        $region58: #{tpu_custom_call.1} parent=55 // pred_check_branch
          %386 = sbr.rel (%p384) target = $region60
        $region59: #{tpu_custom_call.1} parent=55 // pred_region
          %s387 = sand.u32 %s133, 1
          %s388 = scalar_lea.sflag [#allocation5], %s387
          %s389 = sand.u32 %s133, 1
          %s390 = smul.addr %s389, 8
          %s391 = scalar_lea.vmem [#allocation8], %s390
          %392 = dma.done %s388, 128
        $region60: #{tpu_custom_call.1} parent=55 // pred_fallthru
          _
      $region56: #{tpu_custom_call.1} parent=5 // pred_fallthru
        _
    $region6: #{tpu_custom_call.1} parent=1 // loop_footer
      %s20 = sadd.s32 1, %s16
    $region7: #{tpu_custom_call.1} parent=1 // loop_footer_branch
      %15 = sbr.rel target = $region3
    $region8: #{tpu_custom_call.1} parent=1 // loop_exit
      _
    %393 = vsyncpa [#allocation4], 1
    %s394 = scalar_lea.sflag [#allocation4], 1
    %395 = vsyncpa %s394, 1
    %396 = vsyncpa [#allocation7], 1
    %s397 = scalar_lea.sflag [#allocation7], 1
    %398 = vsyncpa %s397, 1
    %399 = vsyncpa [#allocation5], 1
    %s400 = scalar_lea.sflag [#allocation5], 1
    %401 = vsyncpa %s400, 1

</llo_original>
